<compile_context>
chip_gen: v7x
topology: tpu7x:2x2x1
jax: 0.10.0
libtpu: 0.0.40
codegen_flags: <defaults>
</compile_context>

<pallas_src>
import functools

import numpy as np

import jax
import jax.numpy as jnp
from jax.experimental import pallas as pl
from jax.experimental.pallas import tpu as pltpu


def _make_freq_band(n_freqs: int, log_space: bool):
    """Static (Python-float) frequency band, matching the torch module."""
    if log_space:
        freqs = 2.0 ** np.linspace(0.0, n_freqs - 1, n_freqs)
    else:
        freqs = np.linspace(2.0 ** 0.0, 2.0 ** (n_freqs - 1), n_freqs)
    return [float(f) for f in freqs]


def _pos_enc_kernel(x_ref, o_ref, *, freqs, d_input):
    # x_ref: (d_input, TN) VMEM tile ; o_ref: (d_out, TN) VMEM tile (lane-dense)
    x = x_ref[...].astype(jnp.float32)                       # (d_input, TN)

    # Batched sin/cos: one evaluation over a (F*d_input, TN) slab instead of
    # 2F evaluations over (d_input, TN) slabs -> fuller vregs on the VPU.
    fx = jnp.concatenate([f * x for f in freqs], axis=0)     # (F*d_input, TN)
    s = jnp.sin(fx)
    c = jnp.cos(fx)

    # Assemble [x | sin(f1 x) | cos(f1 x) | ...] along the feature (sublane)
    # axis and write the whole tile with a single full-lane store.
    parts = [x]
    for k in range(len(freqs)):
        lo, hi = k * d_input, (k + 1) * d_input
        parts.append(s[lo:hi, :])
        parts.append(c[lo:hi, :])
    o_ref[...] = jnp.concatenate(parts, axis=0).astype(o_ref.dtype)


def positional_encoder_t(xt, n_freqs: int, log_space: bool = False,
                         block_n: int = 2048, out_dtype=None):
    """Native lane-dense path: xt (d_input, N) -> (d_input*(2F+1), N)."""
    d_input, N = xt.shape
    freqs = _make_freq_band(n_freqs, log_space)
    d_out = d_input * (2 * n_freqs + 1)
    out_dtype = xt.dtype if out_dtype is None else out_dtype

    # Lane tile: multiple of 128, clamped so tiny inputs don't over-allocate.
    n_rounded = ((N + 127) // 128) * 128
    block_n = max(128, min(block_n, n_rounded))
    grid = (pl.cdiv(N, block_n),)   # ragged last tile handled by Pallas masking

    kernel = functools.partial(_pos_enc_kernel, freqs=freqs, d_input=d_input)

    return pl.pallas_call(
        kernel,
        out_shape=jax.ShapeDtypeStruct((d_out, N), out_dtype),
        grid_spec=pltpu.PrefetchScalarGridSpec(
            num_scalar_prefetch=0,
            grid=grid,
            in_specs=[pl.BlockSpec((d_input, block_n), lambda i: (0, i))],
            out_specs=pl.BlockSpec((d_out, block_n), lambda i: (0, i)),
        ),
        compiler_params=pltpu.CompilerParams(
            dimension_semantics=("parallel",)),
    )(xt)


def positional_encoder(x, n_freqs: int, log_space: bool = False,
                       block_n: int = 2048, out_dtype=None):
    """Torch-compatible layout: x (..., d_input) -> (..., d_input*(2F+1)).

    The transposes here are layout plumbing only; consumers that can accept a
    (d_out, N) encoding should call positional_encoder_t directly and skip the
    output transpose.
    """
    lead = x.shape[:-1]
    d_input = x.shape[-1]
    x2 = x.reshape(-1, d_input)
    out_t = positional_encoder_t(x2.T, n_freqs, log_space=log_space,
                                 block_n=block_n, out_dtype=out_dtype)
    return out_t.T.reshape(*lead, -1)


def positional_encoder_ref(x, n_freqs: int, log_space: bool = False):
    """Plain-JAX reference mirroring the torch forward exactly."""
    freqs = _make_freq_band(n_freqs, log_space)
    parts = [x]
    for f in freqs:
        parts.append(jnp.sin(f * x))
        parts.append(jnp.cos(f * x))
    return jnp.concatenate(parts, axis=-1)


if __name__ == "__main__":
    key = jax.random.PRNGKey(0)

    # Typical NeRF setup at small scale: 3-D coords, 4 frequency bands.
    d_input = 3
    n_freqs = 4
    N = 256

    x = jax.random.normal(key, (N, d_input), dtype=jnp.float32)

    out = jax.block_until_ready(
        positional_encoder(x, n_freqs=n_freqs, log_space=False))
    ref = positional_encoder_ref(x, n_freqs=n_freqs, log_space=False)
    assert out.shape == (N, d_input * (2 * n_freqs + 1)), out.shape
    assert jnp.allclose(out, ref, atol=1e-5, rtol=1e-5), "mismatch (linspace)"

    # log_space=True path.
    out_log = jax.block_until_ready(
        positional_encoder(x, n_freqs=n_freqs, log_space=True))
    ref_log = positional_encoder_ref(x, n_freqs=n_freqs, log_space=True)
    assert jnp.allclose(out_log, ref_log, atol=1e-5, rtol=1e-5), "mismatch (log)"

    # Ragged N (not a multiple of the lane tile): exercises the no-pad/no-slice
    # path with Pallas partial-block masking.
    x_rag = jax.random.normal(jax.random.PRNGKey(1), (200, d_input),
                              dtype=jnp.float32)
    out_rag = jax.block_until_ready(
        positional_encoder(x_rag, n_freqs=n_freqs, log_space=False))
    ref_rag = positional_encoder_ref(x_rag, n_freqs=n_freqs, log_space=False)
    assert jnp.allclose(out_rag, ref_rag, atol=1e-5, rtol=1e-5), "mismatch (ragged)"

    print("KERNEL_OK")
</pallas_src>

<mosaic_0001>
module attributes {stable_mosaic.version = 11 : i64} {
  func.func @_pos_enc_kernel(%arg0: i32, %arg1: memref<3x256xf32, #tpu.memory_space<vmem>>, %arg2: memref<27x256xf32, #tpu.memory_space<vmem>>) attributes {dimension_semantics = [#tpu.dimension_semantics<parallel>], iteration_bounds = array<i64: 1>, scalar_prefetch = 0 : i64, scratch_operands = 0 : i64, tpu.core_type = #tpu.core_type<tc>, window_params = [{transform_indices = @transform_0, window_bounds = array<i64: 3, 256>}, {transform_indices = @transform_1, window_bounds = array<i64: 27, 256>}]} {
    %c0 = arith.constant 0 : index
    %c0_0 = arith.constant 0 : index
    %0 = vector.load %arg1[%c0, %c0_0] : memref<3x256xf32, #tpu.memory_space<vmem>>, vector<3x256xf32>
    %cst = arith.constant 1.000000e+00 : f32
    %1 = vector.broadcast %cst : f32 to vector<3x256xf32>
    %2 = arith.mulf %1, %0 : vector<3x256xf32>
    %cst_1 = arith.constant 3.33333325 : f32
    %3 = vector.broadcast %cst_1 : f32 to vector<3x256xf32>
    %4 = arith.mulf %3, %0 : vector<3x256xf32>
    %cst_2 = arith.constant 5.66666651 : f32
    %5 = vector.broadcast %cst_2 : f32 to vector<3x256xf32>
    %6 = arith.mulf %5, %0 : vector<3x256xf32>
    %cst_3 = arith.constant 8.000000e+00 : f32
    %7 = vector.broadcast %cst_3 : f32 to vector<3x256xf32>
    %8 = arith.mulf %7, %0 : vector<3x256xf32>
    %9 = tpu.concatenate %2, %4, %6, %8 in 0 : vector<3x256xf32>, vector<3x256xf32>, vector<3x256xf32>, vector<3x256xf32> -> vector<12x256xf32>
    %10 = math.sin %9 : vector<12x256xf32>
    %11 = math.cos %9 : vector<12x256xf32>
    %12 = vector.extract_strided_slice %10 {offsets = [0, 0], sizes = [3, 256], strides = [1, 1]} : vector<12x256xf32> to vector<3x256xf32>
    %13 = vector.extract_strided_slice %11 {offsets = [0, 0], sizes = [3, 256], strides = [1, 1]} : vector<12x256xf32> to vector<3x256xf32>
    %14 = vector.extract_strided_slice %10 {offsets = [3, 0], sizes = [3, 256], strides = [1, 1]} : vector<12x256xf32> to vector<3x256xf32>
    %15 = vector.extract_strided_slice %11 {offsets = [3, 0], sizes = [3, 256], strides = [1, 1]} : vector<12x256xf32> to vector<3x256xf32>
    %16 = vector.extract_strided_slice %10 {offsets = [6, 0], sizes = [3, 256], strides = [1, 1]} : vector<12x256xf32> to vector<3x256xf32>
    %17 = vector.extract_strided_slice %11 {offsets = [6, 0], sizes = [3, 256], strides = [1, 1]} : vector<12x256xf32> to vector<3x256xf32>
    %18 = vector.extract_strided_slice %10 {offsets = [9, 0], sizes = [3, 256], strides = [1, 1]} : vector<12x256xf32> to vector<3x256xf32>
    %19 = vector.extract_strided_slice %11 {offsets = [9, 0], sizes = [3, 256], strides = [1, 1]} : vector<12x256xf32> to vector<3x256xf32>
    %20 = tpu.concatenate %0, %12, %13, %14, %15, %16, %17, %18, %19 in 0 : vector<3x256xf32>, vector<3x256xf32>, vector<3x256xf32>, vector<3x256xf32>, vector<3x256xf32>, vector<3x256xf32>, vector<3x256xf32>, vector<3x256xf32>, vector<3x256xf32> -> vector<27x256xf32>
    %c0_4 = arith.constant 0 : index
    %c0_5 = arith.constant 0 : index
    %21 = vector.load %arg2[%c0_4, %c0_5] : memref<27x256xf32, #tpu.memory_space<vmem>>, vector<27x256xf32>
    tpu.vector_store %arg2[%c0_4, %c0_5], %20 {strides = array<i32>} : memref<27x256xf32, #tpu.memory_space<vmem>>, vector<27x256xf32>,
    return
  }
  func.func @transform_0(%arg0: i32) -> (i32, i32) {
    %c0_i32 = arith.constant 0 : i32
    %c0_i32_0 = arith.constant 0 : i32
    return %c0_i32, %arg0 : i32, i32
  }
  func.func @transform_1(%arg0: i32) -> (i32, i32) {
    %c0_i32 = arith.constant 0 : i32
    %c0_i32_0 = arith.constant 0 : i32
    return %c0_i32, %arg0 : i32, i32
  }
}

</mosaic_0001>

<llo_original>
// kernel: tpu_custom_call.1
$region0: #{tpu_custom_call.1}
  #allocation0 [shape = 'u32[]', space=smem, size = 0x4, offset = 0x4, fixed_abs, tag = 'smem constant byte address 0x4 - core index']
  #allocation1 [shape = 'u32[144,128]{1,0:T(1,128)}', space=vmem, size = 0x12000, scoped, tag = 'internal scratch']
  %s0 = inlined_call_operand.hbm [shape: f32[3,256], index: 0, kind: input, shape index: {}]
  %s1 = inlined_call_operand.hbm [shape: f32[27,256], index: 1, kind: output, shape index: {}]
  %s2 = sld [smem:[#allocation0]]
  $region18: #{tpu_custom_call.1} parent=0
    _
  %s4 = ssub.s32 1, %s2
  %s5 = scalar_select 0, %s4, %s2
  $region1: #{tpu_custom_call.1} parent=0
    #allocation2 [shape = 'u8[4096]{0}', space=vmem, size = 0x1000, scoped, tag = 'input window, operand 0, single buffered']
    #allocation3 [shape = 's32[1]{0}', space=sflag, size = 0x4, scoped, tag = 'scoped memory for tpu_custom_call.1']
    #allocation4 [shape = 's32[1]{0}', space=sflag, size = 0x4, scoped, tag = 'scoped memory for tpu_custom_call.1']
    #allocation5 [shape = 'u8[32768]{0}', space=vmem, size = 0x8000, scoped, tag = 'output window, operand 0, single buffered']
    %6 = vsyncpa [#allocation3], 0
    %7 = vsyncpa [#allocation4], 0
    // Predicated region
    $region2: #{tpu_custom_call.1} parent=1 // pred_check
      _
    $region3: #{tpu_custom_call.1} parent=1 // pred_check_branch
      %9 = sbr.rel (0) target = $region5
    $region4: #{tpu_custom_call.1} parent=1 // pred_region
      %s11 = ssub.s32 128, 128
      %12 = vsyncadd [#allocation3], %s11
      %s14 = sshll.u32 [#allocation2], 4
      %s15 = int_to_ptr.vmem [resolvable:$true] %s14
      %17 = dma.hbm_to_vmem [thread:$0]  %s0, 128, %s15, [#allocation3]
    $region5: #{tpu_custom_call.1} parent=1 // pred_fallthru
      _
    // Predicated region
    $region6: #{tpu_custom_call.1} parent=1 // pred_check
      _
    $region7: #{tpu_custom_call.1} parent=1 // pred_check_branch
      %19 = sbr.rel (0) target = $region9
    $region8: #{tpu_custom_call.1} parent=1 // pred_region
      %20 = dma.done [#allocation3], 128
    $region9: #{tpu_custom_call.1} parent=1 // pred_fallthru
      _
    %v21 = vld [vmem:[#allocation2] sm:$0x77]
    %v22 = vmul.f32 %v21, 3.3333333
    %v23 = vmul.f32 %v21, 5.6666665
    %v24 = vmul.f32 %v21, 8.0
    %v26 = vcombine.high %v21, %v21
    %v29 = vcombine.high %v22, %v22
    %v30 = vrot.slane %v22, 5
    %v31 = vrot.slane %v29, 5
    %v35 = vcombine.high %v23, %v23
    %v36 = vrot.slane %v23, 2
    %v37 = vrot.slane %v35, 2
    %v41 = vcombine.high %v24, %v24
    %v42 = vrot.slane %v24, 7
    %v43 = vrot.slane %v41, 7
    %vm46 = vcmask 1042432
    %v47 = vsel %vm46, %v21, %v30
    %v48 = vsel %vm46, %v26, %v31
    %vm49 = vcmask 1045504
    %v50 = vsel %vm49, %v47, %v36
    %v51 = vsel %vm49, %v48, %v37
    %vm52 = vcmask 1040384
    %v53 = vsel %vm52, %v36, %v42
    %v54 = vsel %vm52, %v37, %v43
    %v55 = vand.u32 2147483647, %v50
    %vm56 = vcmp.le.f32.partialorder %v55, 0.7853982
    %vm57 = vcmp.lt.s32.totalorder %v50, 0
    %v58 = vand.u32 %v50, 2139095040
    %v59 = vshrl.u32 %v58, 23
    %v60 = vsub.s32 %v59, 127
    %v61 = vand.u32 2147483647, %v50
    %v62 = vand.u32 %v61, 8388607
    %v63 = vor.u32 %v62, 8388608
    %v64 = vsub.s32 0, %v63
    %v65 = vadd.s32 %v60, 1
    %vm66 = vcmp.gt.s32.totalorder %v65, 0
    %v67 = vsel %vm66, %v65, 0
    %v68 = vshrl.u32 %v67, 5
    %v69 = vand.u32 %v67, 31
    %v70 = vsub.s32 32, %v69
    %v71 = vshrl.u32 683565275, %v70
    %v72 = vshll.u32 683565275, %v69
    %v73 = vshrl.u32 2475754826, %v70
    %v74 = vor.u32 %v72, %v73
    %v75 = vshll.u32 2475754826, %v69
    %v76 = vshrl.u32 2131351028, %v70
    %v77 = vor.u32 %v75, %v76
    %v78 = vshll.u32 2131351028, %v69
    %v79 = vshrl.u32 2102212464, %v70
    %v80 = vor.u32 %v78, %v79
    %v81 = vshll.u32 2102212464, %v69
    %v82 = vshrl.u32 920167782, %v70
    %v83 = vor.u32 %v81, %v82
    %v84 = vshll.u32 920167782, %v69
    %v85 = vshrl.u32 1326507024, %v70
    %v86 = vor.u32 %v84, %v85
    %vm87 = vcmp.lt.s32.totalorder %v68, 1
    %vm88 = vcmp.lt.s32.totalorder %v68, 2
    %vm89 = vcmp.lt.s32.totalorder %v68, 3
    %vm90 = vcmp.lt.s32.totalorder %v68, 4
    %v91 = vsel %vm87, %v71, %v74
    %v92 = vsel %vm90, %v80, 2102212464
    %v93 = vsel %vm89, %v77, %v92
    %v94 = vsel %vm88, %v91, %v93
    %v95 = vsel %vm87, %v74, %v77
    %v96 = vsel %vm90, %v83, 920167782
    %v97 = vsel %vm89, %v80, %v96
    %v98 = vsel %vm88, %v95, %v97
    %v99 = vsel %vm87, %v77, %v80
    %v100 = vsel %vm90, %v86, 1326507024
    %v101 = vsel %vm89, %v83, %v100
    %v102 = vsel %vm88, %v99, %v101
    %v103 = vshll.u32 %v63, 8
    %v104 = vmul.u32.u64.compose %v103, %v102
    %v105 = vextract.low.u32 %v104
    %v106 = vextract.high.u32 %v104
    %v107 = vmul.u32.u64.compose %v103, %v98
    %v108 = vextract.low.u32 %v107
    %v109 = vextract.high.u32 %v107
    %v110 = vmul.u32 %v103, %v94
    %v111 = vadd.s32 %v106, %v108
    %vm112 = vc.u32 %v106, %v108
    %v113 = vadd.s32 %v109, 1
    %v114 = vsel %vm112, %v113, %v109
    %v115 = vadd.s32 %v110, %v114
    %v116 = vadd.s32 %v115, 536870912
    %v117 = vshrl.u32 %v116, 30
    %v118 = vshll.u32 %v117, 30
    %v119 = vsub.s32 %v115, %v118
    %vm120 = vcmp.lt.s32.totalorder %v119, 0
    %v121 = vsub.s32 0, %v119
    %v122 = vsel %vm120, %v121, %v119
    %v123 = vclz %v122
    %v124 = vsub.s32 %v123, 2
    %vm125 = vcmp.gt.s32.totalorder 0, %v124
    %v126 = vsel %vm125, 0, %v124
    %v127 = vsub.s32 32, %v126
    %v128 = vshll.u32 %v119, %v126
    %v129 = vshrl.u32 %v111, %v127
    %v130 = vor.u32 %v128, %v129
    %v131 = vsub.s32 4294967266, %v126
    %v132 = vadd.s32 %v131, 127
    %v133 = vshll.u32 %v132, 23
    %v134 = vor.u32 4788187, %v133
    %v135 = vand.u32 2147483647, %v134
    %v137 = vcvt.s32.f32 %v130
    %v138 = vmul.f32 %v137, %v135
    %v139 = vxor.u32 %v138, 2147483648
    %v140 = vsel %vm57, %v139, %v138
    %v141 = vsub.s32 4, %v117
    %v142 = vsel %vm57, %v141, %v117
    %v143 = vsel %vm56, %v50, %v140
    %v144 = vsel %vm56, 0, %v142
    %v145 = vcosq.f32.pop %v143
    %v146 = vsinq.f32.pop %v143
    %vm147 = vweird.f32 %v50
    %v148 = vadd.s32 %v144, 3
    %v149 = vand.u32 %v148, 3
    %vm150 = vcmp.lt.s32.totalorder %v149, 2
    %vm151 = vcmp.eq.s32.totalorder %v149, 0
    %v152 = vxor.u32 %v146, 2147483648
    %v153 = vsel %vm151, %v145, %v152
    %vm154 = vcmp.eq.s32.totalorder %v149, 2
    %v155 = vxor.u32 %v145, 2147483648
    %v156 = vsel %vm154, %v155, %v146
    %v157 = vsel %vm150, %v153, %v156
    %v158 = vsel %vm147, nan, %v157
    %v159 = vand.u32 2147483647, %v51
    %vm160 = vcmp.le.f32.partialorder %v159, 0.7853982
    %vm161 = vcmp.lt.s32.totalorder %v51, 0
    %v162 = vand.u32 %v51, 2139095040
    %v163 = vshrl.u32 %v162, 23
    %v164 = vsub.s32 %v163, 127
    %v165 = vand.u32 2147483647, %v51
    %v166 = vand.u32 %v165, 8388607
    %v167 = vor.u32 %v166, 8388608
    %v168 = vsub.s32 0, %v167
    %v169 = vadd.s32 %v164, 1
    %vm170 = vcmp.gt.s32.totalorder %v169, 0
    %v171 = vsel %vm170, %v169, 0
    %v172 = vshrl.u32 %v171, 5
    %v173 = vand.u32 %v171, 31
    %v174 = vsub.s32 32, %v173
    %v175 = vshrl.u32 683565275, %v174
    %v176 = vshll.u32 683565275, %v173
    %v177 = vshrl.u32 2475754826, %v174
    %v178 = vor.u32 %v176, %v177
    %v179 = vshll.u32 2475754826, %v173
    %v180 = vshrl.u32 2131351028, %v174
    %v181 = vor.u32 %v179, %v180
    %v182 = vshll.u32 2131351028, %v173
    %v183 = vshrl.u32 2102212464, %v174
    %v184 = vor.u32 %v182, %v183
    %v185 = vshll.u32 2102212464, %v173
    %v186 = vshrl.u32 920167782, %v174
    %v187 = vor.u32 %v185, %v186
    %v188 = vshll.u32 920167782, %v173
    %v189 = vshrl.u32 1326507024, %v174
    %v190 = vor.u32 %v188, %v189
    %vm191 = vcmp.lt.s32.totalorder %v172, 1
    %vm192 = vcmp.lt.s32.totalorder %v172, 2
    %vm193 = vcmp.lt.s32.totalorder %v172, 3
    %vm194 = vcmp.lt.s32.totalorder %v172, 4
    %v195 = vsel %vm191, %v175, %v178
    %v196 = vsel %vm194, %v184, 2102212464
    %v197 = vsel %vm193, %v181, %v196
    %v198 = vsel %vm192, %v195, %v197
    %v199 = vsel %vm191, %v178, %v181
    %v200 = vsel %vm194, %v187, 920167782
    %v201 = vsel %vm193, %v184, %v200
    %v202 = vsel %vm192, %v199, %v201
    %v203 = vsel %vm191, %v181, %v184
    %v204 = vsel %vm194, %v190, 1326507024
    %v205 = vsel %vm193, %v187, %v204
    %v206 = vsel %vm192, %v203, %v205
    %v207 = vshll.u32 %v167, 8
    %v208 = vmul.u32.u64.compose %v207, %v206
    %v209 = vextract.low.u32 %v208
    %v210 = vextract.high.u32 %v208
    %v211 = vmul.u32.u64.compose %v207, %v202
    %v212 = vextract.low.u32 %v211
    %v213 = vextract.high.u32 %v211
    %v214 = vmul.u32 %v207, %v198
    %v215 = vadd.s32 %v210, %v212
    %vm216 = vc.u32 %v210, %v212
    %v217 = vadd.s32 %v213, 1
    %v218 = vsel %vm216, %v217, %v213
    %v219 = vadd.s32 %v214, %v218
    %v220 = vadd.s32 %v219, 536870912
    %v221 = vshrl.u32 %v220, 30
    %v222 = vshll.u32 %v221, 30
    %v223 = vsub.s32 %v219, %v222
    %vm224 = vcmp.lt.s32.totalorder %v223, 0
    %v225 = vsub.s32 0, %v223
    %v226 = vsel %vm224, %v225, %v223
    %v227 = vclz %v226
    %v228 = vsub.s32 %v227, 2
    %vm229 = vcmp.gt.s32.totalorder 0, %v228
    %v230 = vsel %vm229, 0, %v228
    %v231 = vsub.s32 32, %v230
    %v232 = vshll.u32 %v223, %v230
    %v233 = vshrl.u32 %v215, %v231
    %v234 = vor.u32 %v232, %v233
    %v235 = vsub.s32 4294967266, %v230
    %v236 = vadd.s32 %v235, 127
    %v237 = vshll.u32 %v236, 23
    %v238 = vor.u32 4788187, %v237
    %v239 = vand.u32 2147483647, %v238
    %v241 = vcvt.s32.f32 %v234
    %v242 = vmul.f32 %v241, %v239
    %v243 = vxor.u32 %v242, 2147483648
    %v244 = vsel %vm161, %v243, %v242
    %v245 = vsub.s32 4, %v221
    %v246 = vsel %vm161, %v245, %v221
    %v247 = vsel %vm160, %v51, %v244
    %v248 = vsel %vm160, 0, %v246
    %v249 = vcosq.f32.pop %v247
    %v250 = vsinq.f32.pop %v247
    %vm251 = vweird.f32 %v51
    %v252 = vadd.s32 %v248, 3
    %v253 = vand.u32 %v252, 3
    %vm254 = vcmp.lt.s32.totalorder %v253, 2
    %vm255 = vcmp.eq.s32.totalorder %v253, 0
    %v256 = vxor.u32 %v250, 2147483648
    %v257 = vsel %vm255, %v249, %v256
    %vm258 = vcmp.eq.s32.totalorder %v253, 2
    %v259 = vxor.u32 %v249, 2147483648
    %v260 = vsel %vm258, %v259, %v250
    %v261 = vsel %vm254, %v257, %v260
    %v262 = vsel %vm251, nan, %v261
    %v263 = vand.u32 2147483647, %v53
    %vm264 = vcmp.le.f32.partialorder %v263, 0.7853982
    %vm265 = vcmp.lt.s32.totalorder %v53, 0
    %v266 = vand.u32 %v53, 2139095040
    %v267 = vshrl.u32 %v266, 23
    %v268 = vsub.s32 %v267, 127
    %v269 = vand.u32 2147483647, %v53
    %v270 = vand.u32 %v269, 8388607
    %v271 = vor.u32 %v270, 8388608
    %v272 = vsub.s32 0, %v271
    %v273 = vadd.s32 %v268, 1
    %vm274 = vcmp.gt.s32.totalorder %v273, 0
    %v275 = vsel %vm274, %v273, 0
    %v276 = vshrl.u32 %v275, 5
    %v277 = vand.u32 %v275, 31
    %v278 = vsub.s32 32, %v277
    %v279 = vshrl.u32 683565275, %v278
    %v280 = vshll.u32 683565275, %v277
    %v281 = vshrl.u32 2475754826, %v278
    %v282 = vor.u32 %v280, %v281
    %v283 = vshll.u32 2475754826, %v277
    %v284 = vshrl.u32 2131351028, %v278
    %v285 = vor.u32 %v283, %v284
    %v286 = vshll.u32 2131351028, %v277
    %v287 = vshrl.u32 2102212464, %v278
    %v288 = vor.u32 %v286, %v287
    %v289 = vshll.u32 2102212464, %v277
    %v290 = vshrl.u32 920167782, %v278
    %v291 = vor.u32 %v289, %v290
    %v292 = vshll.u32 920167782, %v277
    %v293 = vshrl.u32 1326507024, %v278
    %v294 = vor.u32 %v292, %v293
    %vm295 = vcmp.lt.s32.totalorder %v276, 1
    %vm296 = vcmp.lt.s32.totalorder %v276, 2
    %vm297 = vcmp.lt.s32.totalorder %v276, 3
    %vm298 = vcmp.lt.s32.totalorder %v276, 4
    %v299 = vsel %vm295, %v279, %v282
    %v300 = vsel %vm298, %v288, 2102212464
    %v301 = vsel %vm297, %v285, %v300
    %v302 = vsel %vm296, %v299, %v301
    %v303 = vsel %vm295, %v282, %v285
    %v304 = vsel %vm298, %v291, 920167782
    %v305 = vsel %vm297, %v288, %v304
    %v306 = vsel %vm296, %v303, %v305
    %v307 = vsel %vm295, %v285, %v288
    %v308 = vsel %vm298, %v294, 1326507024
    %v309 = vsel %vm297, %v291, %v308
    %v310 = vsel %vm296, %v307, %v309
    %v311 = vshll.u32 %v271, 8
    %v312 = vmul.u32.u64.compose %v311, %v310
    %v313 = vextract.low.u32 %v312
    %v314 = vextract.high.u32 %v312
    %v315 = vmul.u32.u64.compose %v311, %v306
    %v316 = vextract.low.u32 %v315
    %v317 = vextract.high.u32 %v315
    %v318 = vmul.u32 %v311, %v302
    %v319 = vadd.s32 %v314, %v316
    %vm320 = vc.u32 %v314, %v316
    %v321 = vadd.s32 %v317, 1
    %v322 = vsel %vm320, %v321, %v317
    %v323 = vadd.s32 %v318, %v322
    %v324 = vadd.s32 %v323, 536870912
    %v325 = vshrl.u32 %v324, 30
    %v326 = vshll.u32 %v325, 30
    %v327 = vsub.s32 %v323, %v326
    %vm328 = vcmp.lt.s32.totalorder %v327, 0
    %v329 = vsub.s32 0, %v327
    %v330 = vsel %vm328, %v329, %v327
    %v331 = vclz %v330
    %v332 = vsub.s32 %v331, 2
    %vm333 = vcmp.gt.s32.totalorder 0, %v332
    %v334 = vsel %vm333, 0, %v332
    %v335 = vsub.s32 32, %v334
    %v336 = vshll.u32 %v327, %v334
    %v337 = vshrl.u32 %v319, %v335
    %v338 = vor.u32 %v336, %v337
    %v339 = vsub.s32 4294967266, %v334
    %v340 = vadd.s32 %v339, 127
    %v341 = vshll.u32 %v340, 23
    %v342 = vor.u32 4788187, %v341
    %v343 = vand.u32 2147483647, %v342
    %v345 = vcvt.s32.f32 %v338
    %v346 = vmul.f32 %v345, %v343
    %v347 = vxor.u32 %v346, 2147483648
    %v348 = vsel %vm265, %v347, %v346
    %v349 = vsub.s32 4, %v325
    %v350 = vsel %vm265, %v349, %v325
    %v351 = vsel %vm264, %v53, %v348
    %v352 = vsel %vm264, 0, %v350
    %v353 = vcosq.f32.pop %v351
    %v354 = vsinq.f32.pop %v351
    %vm355 = vweird.f32 %v53
    %v356 = vadd.s32 %v352, 3
    %v357 = vand.u32 %v356, 3
    %vm358 = vcmp.lt.s32.totalorder %v357, 2
    %vm359 = vcmp.eq.s32.totalorder %v357, 0
    %v360 = vxor.u32 %v354, 2147483648
    %v361 = vsel %vm359, %v353, %v360
    %vm362 = vcmp.eq.s32.totalorder %v357, 2
    %v363 = vxor.u32 %v353, 2147483648
    %v364 = vsel %vm362, %v363, %v354
    %v365 = vsel %vm358, %v361, %v364
    %v366 = vsel %vm355, nan, %v365
    %v367 = vand.u32 2147483647, %v54
    %vm368 = vcmp.le.f32.partialorder %v367, 0.7853982
    %vm369 = vcmp.lt.s32.totalorder %v54, 0
    %v370 = vand.u32 %v54, 2139095040
    %v371 = vshrl.u32 %v370, 23
    %v372 = vsub.s32 %v371, 127
    %v373 = vand.u32 2147483647, %v54
    %v374 = vand.u32 %v373, 8388607
    %v375 = vor.u32 %v374, 8388608
    %v376 = vsub.s32 0, %v375
    %v377 = vadd.s32 %v372, 1
    %vm378 = vcmp.gt.s32.totalorder %v377, 0
    %v379 = vsel %vm378, %v377, 0
    %v380 = vshrl.u32 %v379, 5
    %v381 = vand.u32 %v379, 31
    %v382 = vsub.s32 32, %v381
    %v383 = vshrl.u32 683565275, %v382
    %v384 = vshll.u32 683565275, %v381
    %v385 = vshrl.u32 2475754826, %v382
    %v386 = vor.u32 %v384, %v385
    %v387 = vshll.u32 2475754826, %v381
    %v388 = vshrl.u32 2131351028, %v382
    %v389 = vor.u32 %v387, %v388
    %v390 = vshll.u32 2131351028, %v381
    %v391 = vshrl.u32 2102212464, %v382
    %v392 = vor.u32 %v390, %v391
    %v393 = vshll.u32 2102212464, %v381
    %v394 = vshrl.u32 920167782, %v382
    %v395 = vor.u32 %v393, %v394
    %v396 = vshll.u32 920167782, %v381
    %v397 = vshrl.u32 1326507024, %v382
    %v398 = vor.u32 %v396, %v397
    %vm399 = vcmp.lt.s32.totalorder %v380, 1
    %vm400 = vcmp.lt.s32.totalorder %v380, 2
    %vm401 = vcmp.lt.s32.totalorder %v380, 3
    %vm402 = vcmp.lt.s32.totalorder %v380, 4
    %v403 = vsel %vm399, %v383, %v386
    %v404 = vsel %vm402, %v392, 2102212464
    %v405 = vsel %vm401, %v389, %v404
    %v406 = vsel %vm400, %v403, %v405
    %v407 = vsel %vm399, %v386, %v389
    %v408 = vsel %vm402, %v395, 920167782
    %v409 = vsel %vm401, %v392, %v408
    %v410 = vsel %vm400, %v407, %v409
    %v411 = vsel %vm399, %v389, %v392
    %v412 = vsel %vm402, %v398, 1326507024
    %v413 = vsel %vm401, %v395, %v412
    %v414 = vsel %vm400, %v411, %v413
    %v415 = vshll.u32 %v375, 8
    %v416 = vmul.u32.u64.compose %v415, %v414
    %v417 = vextract.low.u32 %v416
    %v418 = vextract.high.u32 %v416
    %v419 = vmul.u32.u64.compose %v415, %v410
    %v420 = vextract.low.u32 %v419
    %v421 = vextract.high.u32 %v419
    %v422 = vmul.u32 %v415, %v406
    %v423 = vadd.s32 %v418, %v420
    %vm424 = vc.u32 %v418, %v420
    %v425 = vadd.s32 %v421, 1
    %v426 = vsel %vm424, %v425, %v421
    %v427 = vadd.s32 %v422, %v426
    %v428 = vadd.s32 %v427, 536870912
    %v429 = vshrl.u32 %v428, 30
    %v430 = vshll.u32 %v429, 30
    %v431 = vsub.s32 %v427, %v430
    %vm432 = vcmp.lt.s32.totalorder %v431, 0
    %v433 = vsub.s32 0, %v431
    %v434 = vsel %vm432, %v433, %v431
    %v435 = vclz %v434
    %v436 = vsub.s32 %v435, 2
    %vm437 = vcmp.gt.s32.totalorder 0, %v436
    %v438 = vsel %vm437, 0, %v436
    %v439 = vsub.s32 32, %v438
    %v440 = vshll.u32 %v431, %v438
    %v441 = vshrl.u32 %v423, %v439
    %v442 = vor.u32 %v440, %v441
    %v443 = vsub.s32 4294967266, %v438
    %v444 = vadd.s32 %v443, 127
    %v445 = vshll.u32 %v444, 23
    %v446 = vor.u32 4788187, %v445
    %v447 = vand.u32 2147483647, %v446
    %v449 = vcvt.s32.f32 %v442
    %v450 = vmul.f32 %v449, %v447
    %v451 = vxor.u32 %v450, 2147483648
    %v452 = vsel %vm369, %v451, %v450
    %v453 = vsub.s32 4, %v429
    %v454 = vsel %vm369, %v453, %v429
    %v455 = vsel %vm368, %v54, %v452
    %v456 = vsel %vm368, 0, %v454
    %v457 = vcosq.f32.pop %v455
    %v458 = vsinq.f32.pop %v455
    %vm459 = vweird.f32 %v54
    %v460 = vadd.s32 %v456, 3
    %v461 = vand.u32 %v460, 3
    %vm462 = vcmp.lt.s32.totalorder %v461, 2
    %vm463 = vcmp.eq.s32.totalorder %v461, 0
    %v464 = vxor.u32 %v458, 2147483648
    %v465 = vsel %vm463, %v457, %v464
    %vm466 = vcmp.eq.s32.totalorder %v461, 2
    %v467 = vxor.u32 %v457, 2147483648
    %v468 = vsel %vm466, %v467, %v458
    %v469 = vsel %vm462, %v465, %v468
    %v470 = vsel %vm459, nan, %v469
    %v471 = vand.u32 2147483647, %v50
    %vm472 = vcmp.le.f32.partialorder %v471, 0.7853982
    %vm473 = vcmp.lt.s32.totalorder %v50, 0
    %v474 = vand.u32 %v50, 2139095040
    %v475 = vshrl.u32 %v474, 23
    %v476 = vsub.s32 %v475, 127
    %v477 = vand.u32 2147483647, %v50
    %v478 = vand.u32 %v477, 8388607
    %v479 = vor.u32 %v478, 8388608
    %v480 = vsub.s32 0, %v479
    %v481 = vadd.s32 %v476, 1
    %vm482 = vcmp.gt.s32.totalorder %v481, 0
    %v483 = vsel %vm482, %v481, 0
    %v484 = vshrl.u32 %v483, 5
    %v485 = vand.u32 %v483, 31
    %v486 = vsub.s32 32, %v485
    %v487 = vshrl.u32 683565275, %v486
    %v488 = vshll.u32 683565275, %v485
    %v489 = vshrl.u32 2475754826, %v486
    %v490 = vor.u32 %v488, %v489
    %v491 = vshll.u32 2475754826, %v485
    %v492 = vshrl.u32 2131351028, %v486
    %v493 = vor.u32 %v491, %v492
    %v494 = vshll.u32 2131351028, %v485
    %v495 = vshrl.u32 2102212464, %v486
    %v496 = vor.u32 %v494, %v495
    %v497 = vshll.u32 2102212464, %v485
    %v498 = vshrl.u32 920167782, %v486
    %v499 = vor.u32 %v497, %v498
    %v500 = vshll.u32 920167782, %v485
    %v501 = vshrl.u32 1326507024, %v486
    %v502 = vor.u32 %v500, %v501
    %vm503 = vcmp.lt.s32.totalorder %v484, 1
    %vm504 = vcmp.lt.s32.totalorder %v484, 2
    %vm505 = vcmp.lt.s32.totalorder %v484, 3
    %vm506 = vcmp.lt.s32.totalorder %v484, 4
    %v507 = vsel %vm503, %v487, %v490
    %v508 = vsel %vm506, %v496, 2102212464
    %v509 = vsel %vm505, %v493, %v508
    %v510 = vsel %vm504, %v507, %v509
    %v511 = vsel %vm503, %v490, %v493
    %v512 = vsel %vm506, %v499, 920167782
    %v513 = vsel %vm505, %v496, %v512
    %v514 = vsel %vm504, %v511, %v513
    %v515 = vsel %vm503, %v493, %v496
    %v516 = vsel %vm506, %v502, 1326507024
    %v517 = vsel %vm505, %v499, %v516
    %v518 = vsel %vm504, %v515, %v517
    %v519 = vshll.u32 %v479, 8
    %v520 = vmul.u32.u64.compose %v519, %v518
    %v521 = vextract.low.u32 %v520
    %v522 = vextract.high.u32 %v520
    %v523 = vmul.u32.u64.compose %v519, %v514
    %v524 = vextract.low.u32 %v523
    %v525 = vextract.high.u32 %v523
    %v526 = vmul.u32 %v519, %v510
    %v527 = vadd.s32 %v522, %v524
    %vm528 = vc.u32 %v522, %v524
    %v529 = vadd.s32 %v525, 1
    %v530 = vsel %vm528, %v529, %v525
    %v531 = vadd.s32 %v526, %v530
    %v532 = vadd.s32 %v531, 536870912
    %v533 = vshrl.u32 %v532, 30
    %v534 = vshll.u32 %v533, 30
    %v535 = vsub.s32 %v531, %v534
    %vm536 = vcmp.lt.s32.totalorder %v535, 0
    %v537 = vsub.s32 0, %v535
    %v538 = vsel %vm536, %v537, %v535
    %v539 = vclz %v538
    %v540 = vsub.s32 %v539, 2
    %vm541 = vcmp.gt.s32.totalorder 0, %v540
    %v542 = vsel %vm541, 0, %v540
    %v543 = vsub.s32 32, %v542
    %v544 = vshll.u32 %v535, %v542
    %v545 = vshrl.u32 %v527, %v543
    %v546 = vor.u32 %v544, %v545
    %v547 = vsub.s32 4294967266, %v542
    %v548 = vadd.s32 %v547, 127
    %v549 = vshll.u32 %v548, 23
    %v550 = vor.u32 4788187, %v549
    %v551 = vand.u32 2147483647, %v550
    %v553 = vcvt.s32.f32 %v546
    %v554 = vmul.f32 %v553, %v551
    %v555 = vxor.u32 %v554, 2147483648
    %v556 = vsel %vm473, %v555, %v554
    %v557 = vsub.s32 4, %v533
    %v558 = vsel %vm473, %v557, %v533
    %v559 = vsel %vm472, %v50, %v556
    %v560 = vsel %vm472, 0, %v558
    %v561 = vcosq.f32.pop %v559
    %v562 = vsinq.f32.pop %v559
    %vm563 = vweird.f32 %v50
    %v564 = vand.u32 %v560, 3
    %vm565 = vcmp.lt.s32.totalorder %v564, 2
    %vm566 = vcmp.eq.s32.totalorder %v564, 0
    %v567 = vxor.u32 %v562, 2147483648
    %v568 = vsel %vm566, %v561, %v567
    %vm569 = vcmp.eq.s32.totalorder %v564, 2
    %v570 = vxor.u32 %v561, 2147483648
    %v571 = vsel %vm569, %v570, %v562
    %v572 = vsel %vm565, %v568, %v571
    %v573 = vsel %vm563, nan, %v572
    %v574 = vand.u32 2147483647, %v51
    %vm575 = vcmp.le.f32.partialorder %v574, 0.7853982
    %vm576 = vcmp.lt.s32.totalorder %v51, 0
    %v577 = vand.u32 %v51, 2139095040
    %v578 = vshrl.u32 %v577, 23
    %v579 = vsub.s32 %v578, 127
    %v580 = vand.u32 2147483647, %v51
    %v581 = vand.u32 %v580, 8388607
    %v582 = vor.u32 %v581, 8388608
    %v583 = vsub.s32 0, %v582
    %v584 = vadd.s32 %v579, 1
    %vm585 = vcmp.gt.s32.totalorder %v584, 0
    %v586 = vsel %vm585, %v584, 0
    %v587 = vshrl.u32 %v586, 5
    %v588 = vand.u32 %v586, 31
    %v589 = vsub.s32 32, %v588
    %v590 = vshrl.u32 683565275, %v589
    %v591 = vshll.u32 683565275, %v588
    %v592 = vshrl.u32 2475754826, %v589
    %v593 = vor.u32 %v591, %v592
    %v594 = vshll.u32 2475754826, %v588
    %v595 = vshrl.u32 2131351028, %v589
    %v596 = vor.u32 %v594, %v595
    %v597 = vshll.u32 2131351028, %v588
    %v598 = vshrl.u32 2102212464, %v589
    %v599 = vor.u32 %v597, %v598
    %v600 = vshll.u32 2102212464, %v588
    %v601 = vshrl.u32 920167782, %v589
    %v602 = vor.u32 %v600, %v601
    %v603 = vshll.u32 920167782, %v588
    %v604 = vshrl.u32 1326507024, %v589
    %v605 = vor.u32 %v603, %v604
    %vm606 = vcmp.lt.s32.totalorder %v587, 1
    %vm607 = vcmp.lt.s32.totalorder %v587, 2
    %vm608 = vcmp.lt.s32.totalorder %v587, 3
    %vm609 = vcmp.lt.s32.totalorder %v587, 4
    %v610 = vsel %vm606, %v590, %v593
    %v611 = vsel %vm609, %v599, 2102212464
    %v612 = vsel %vm608, %v596, %v611
    %v613 = vsel %vm607, %v610, %v612
    %v614 = vsel %vm606, %v593, %v596
    %v615 = vsel %vm609, %v602, 920167782
    %v616 = vsel %vm608, %v599, %v615
    %v617 = vsel %vm607, %v614, %v616
    %v618 = vsel %vm606, %v596, %v599
    %v619 = vsel %vm609, %v605, 1326507024
    %v620 = vsel %vm608, %v602, %v619
    %v621 = vsel %vm607, %v618, %v620
    %v622 = vshll.u32 %v582, 8
    %v623 = vmul.u32.u64.compose %v622, %v621
    %v624 = vextract.low.u32 %v623
    %v625 = vextract.high.u32 %v623
    %v626 = vmul.u32.u64.compose %v622, %v617
    %v627 = vextract.low.u32 %v626
    %v628 = vextract.high.u32 %v626
    %v629 = vmul.u32 %v622, %v613
    %v630 = vadd.s32 %v625, %v627
    %vm631 = vc.u32 %v625, %v627
    %v632 = vadd.s32 %v628, 1
    %v633 = vsel %vm631, %v632, %v628
    %v634 = vadd.s32 %v629, %v633
    %v635 = vadd.s32 %v634, 536870912
    %v636 = vshrl.u32 %v635, 30
    %v637 = vshll.u32 %v636, 30
    %v638 = vsub.s32 %v634, %v637
    %vm639 = vcmp.lt.s32.totalorder %v638, 0
    %v640 = vsub.s32 0, %v638
    %v641 = vsel %vm639, %v640, %v638
    %v642 = vclz %v641
    %v643 = vsub.s32 %v642, 2
    %vm644 = vcmp.gt.s32.totalorder 0, %v643
    %v645 = vsel %vm644, 0, %v643
    %v646 = vsub.s32 32, %v645
    %v647 = vshll.u32 %v638, %v645
    %v648 = vshrl.u32 %v630, %v646
    %v649 = vor.u32 %v647, %v648
    %v650 = vsub.s32 4294967266, %v645
    %v651 = vadd.s32 %v650, 127
    %v652 = vshll.u32 %v651, 23
    %v653 = vor.u32 4788187, %v652
    %v654 = vand.u32 2147483647, %v653
    %v656 = vcvt.s32.f32 %v649
    %v657 = vmul.f32 %v656, %v654
    %v658 = vxor.u32 %v657, 2147483648
    %v659 = vsel %vm576, %v658, %v657
    %v660 = vsub.s32 4, %v636
    %v661 = vsel %vm576, %v660, %v636
    %v662 = vsel %vm575, %v51, %v659
    %v663 = vsel %vm575, 0, %v661
    %v664 = vcosq.f32.pop %v662
    %v665 = vsinq.f32.pop %v662
    %vm666 = vweird.f32 %v51
    %v667 = vand.u32 %v663, 3
    %vm668 = vcmp.lt.s32.totalorder %v667, 2
    %vm669 = vcmp.eq.s32.totalorder %v667, 0
    %v670 = vxor.u32 %v665, 2147483648
    %v671 = vsel %vm669, %v664, %v670
    %vm672 = vcmp.eq.s32.totalorder %v667, 2
    %v673 = vxor.u32 %v664, 2147483648
    %v674 = vsel %vm672, %v673, %v665
    %v675 = vsel %vm668, %v671, %v674
    %v676 = vsel %vm666, nan, %v675
    %v677 = vand.u32 2147483647, %v53
    %vm678 = vcmp.le.f32.partialorder %v677, 0.7853982
    %vm679 = vcmp.lt.s32.totalorder %v53, 0
    %v680 = vand.u32 %v53, 2139095040
    %v681 = vshrl.u32 %v680, 23
    %v682 = vsub.s32 %v681, 127
    %v683 = vand.u32 2147483647, %v53
    %v684 = vand.u32 %v683, 8388607
    %v685 = vor.u32 %v684, 8388608
    %v686 = vsub.s32 0, %v685
    %v687 = vadd.s32 %v682, 1
    %vm688 = vcmp.gt.s32.totalorder %v687, 0
    %v689 = vsel %vm688, %v687, 0
    %v690 = vshrl.u32 %v689, 5
    %v691 = vand.u32 %v689, 31
    %v692 = vsub.s32 32, %v691
    %v693 = vshrl.u32 683565275, %v692
    %v694 = vshll.u32 683565275, %v691
    %v695 = vshrl.u32 2475754826, %v692
    %v696 = vor.u32 %v694, %v695
    %v697 = vshll.u32 2475754826, %v691
    %v698 = vshrl.u32 2131351028, %v692
    %v699 = vor.u32 %v697, %v698
    %v700 = vshll.u32 2131351028, %v691
    %v701 = vshrl.u32 2102212464, %v692
    %v702 = vor.u32 %v700, %v701
    %v703 = vshll.u32 2102212464, %v691
    %v704 = vshrl.u32 920167782, %v692
    %v705 = vor.u32 %v703, %v704
    %v706 = vshll.u32 920167782, %v691
    %v707 = vshrl.u32 1326507024, %v692
    %v708 = vor.u32 %v706, %v707
    %vm709 = vcmp.lt.s32.totalorder %v690, 1
    %vm710 = vcmp.lt.s32.totalorder %v690, 2
    %vm711 = vcmp.lt.s32.totalorder %v690, 3
    %vm712 = vcmp.lt.s32.totalorder %v690, 4
    %v713 = vsel %vm709, %v693, %v696
    %v714 = vsel %vm712, %v702, 2102212464
    %v715 = vsel %vm711, %v699, %v714
    %v716 = vsel %vm710, %v713, %v715
    %v717 = vsel %vm709, %v696, %v699
    %v718 = vsel %vm712, %v705, 920167782
    %v719 = vsel %vm711, %v702, %v718
    %v720 = vsel %vm710, %v717, %v719
    %v721 = vsel %vm709, %v699, %v702
    %v722 = vsel %vm712, %v708, 1326507024
    %v723 = vsel %vm711, %v705, %v722
    %v724 = vsel %vm710, %v721, %v723
    %v725 = vshll.u32 %v685, 8
    %v726 = vmul.u32.u64.compose %v725, %v724
    %v727 = vextract.low.u32 %v726
    %v728 = vextract.high.u32 %v726
    %v729 = vmul.u32.u64.compose %v725, %v720
    %v730 = vextract.low.u32 %v729
    %v731 = vextract.high.u32 %v729
    %v732 = vmul.u32 %v725, %v716
    %v733 = vadd.s32 %v728, %v730
    %vm734 = vc.u32 %v728, %v730
    %v735 = vadd.s32 %v731, 1
    %v736 = vsel %vm734, %v735, %v731
    %v737 = vadd.s32 %v732, %v736
    %v738 = vadd.s32 %v737, 536870912
    %v739 = vshrl.u32 %v738, 30
    %v740 = vshll.u32 %v739, 30
    %v741 = vsub.s32 %v737, %v740
    %vm742 = vcmp.lt.s32.totalorder %v741, 0
    %v743 = vsub.s32 0, %v741
    %v744 = vsel %vm742, %v743, %v741
    %v745 = vclz %v744
    %v746 = vsub.s32 %v745, 2
    %vm747 = vcmp.gt.s32.totalorder 0, %v746
    %v748 = vsel %vm747, 0, %v746
    %v749 = vsub.s32 32, %v748
    %v750 = vshll.u32 %v741, %v748
    %v751 = vshrl.u32 %v733, %v749
    %v752 = vor.u32 %v750, %v751
    %v753 = vsub.s32 4294967266, %v748
    %v754 = vadd.s32 %v753, 127
    %v755 = vshll.u32 %v754, 23
    %v756 = vor.u32 4788187, %v755
    %v757 = vand.u32 2147483647, %v756
    %v759 = vcvt.s32.f32 %v752
    %v760 = vmul.f32 %v759, %v757
    %v761 = vxor.u32 %v760, 2147483648
    %v762 = vsel %vm679, %v761, %v760
    %v763 = vsub.s32 4, %v739
    %v764 = vsel %vm679, %v763, %v739
    %v765 = vsel %vm678, %v53, %v762
    %v766 = vsel %vm678, 0, %v764
    %v767 = vcosq.f32.pop %v765
    %v768 = vsinq.f32.pop %v765
    %vm769 = vweird.f32 %v53
    %v770 = vand.u32 %v766, 3
    %vm771 = vcmp.lt.s32.totalorder %v770, 2
    %vm772 = vcmp.eq.s32.totalorder %v770, 0
    %v773 = vxor.u32 %v768, 2147483648
    %v774 = vsel %vm772, %v767, %v773
    %vm775 = vcmp.eq.s32.totalorder %v770, 2
    %v776 = vxor.u32 %v767, 2147483648
    %v777 = vsel %vm775, %v776, %v768
    %v778 = vsel %vm771, %v774, %v777
    %v779 = vsel %vm769, nan, %v778
    %v780 = vand.u32 2147483647, %v54
    %vm781 = vcmp.le.f32.partialorder %v780, 0.7853982
    %vm782 = vcmp.lt.s32.totalorder %v54, 0
    %v783 = vand.u32 %v54, 2139095040
    %v784 = vshrl.u32 %v783, 23
    %v785 = vsub.s32 %v784, 127
    %v786 = vand.u32 2147483647, %v54
    %v787 = vand.u32 %v786, 8388607
    %v788 = vor.u32 %v787, 8388608
    %v789 = vsub.s32 0, %v788
    %v790 = vadd.s32 %v785, 1
    %vm791 = vcmp.gt.s32.totalorder %v790, 0
    %v792 = vsel %vm791, %v790, 0
    %v793 = vshrl.u32 %v792, 5
    %v794 = vand.u32 %v792, 31
    %v795 = vsub.s32 32, %v794
    %v796 = vshrl.u32 683565275, %v795
    %v797 = vshll.u32 683565275, %v794
    %v798 = vshrl.u32 2475754826, %v795
    %v799 = vor.u32 %v797, %v798
    %v800 = vshll.u32 2475754826, %v794
    %v801 = vshrl.u32 2131351028, %v795
    %v802 = vor.u32 %v800, %v801
    %v803 = vshll.u32 2131351028, %v794
    %v804 = vshrl.u32 2102212464, %v795
    %v805 = vor.u32 %v803, %v804
    %v806 = vshll.u32 2102212464, %v794
    %v807 = vshrl.u32 920167782, %v795
    %v808 = vor.u32 %v806, %v807
    %v809 = vshll.u32 920167782, %v794
    %v810 = vshrl.u32 1326507024, %v795
    %v811 = vor.u32 %v809, %v810
    %vm812 = vcmp.lt.s32.totalorder %v793, 1
    %vm813 = vcmp.lt.s32.totalorder %v793, 2
    %vm814 = vcmp.lt.s32.totalorder %v793, 3
    %vm815 = vcmp.lt.s32.totalorder %v793, 4
    %v816 = vsel %vm812, %v796, %v799
    %v817 = vsel %vm815, %v805, 2102212464
    %v818 = vsel %vm814, %v802, %v817
    %v819 = vsel %vm813, %v816, %v818
    %v820 = vsel %vm812, %v799, %v802
    %v821 = vsel %vm815, %v808, 920167782
    %v822 = vsel %vm814, %v805, %v821
    %v823 = vsel %vm813, %v820, %v822
    %v824 = vsel %vm812, %v802, %v805
    %v825 = vsel %vm815, %v811, 1326507024
    %v826 = vsel %vm814, %v808, %v825
    %v827 = vsel %vm813, %v824, %v826
    %v828 = vshll.u32 %v788, 8
    %v829 = vmul.u32.u64.compose %v828, %v827
    %v830 = vextract.low.u32 %v829
    %v831 = vextract.high.u32 %v829
    %v832 = vmul.u32.u64.compose %v828, %v823
    %v833 = vextract.low.u32 %v832
    %v834 = vextract.high.u32 %v832
    %v835 = vmul.u32 %v828, %v819
    %v836 = vadd.s32 %v831, %v833
    %vm837 = vc.u32 %v831, %v833
    %v838 = vadd.s32 %v834, 1
    %v839 = vsel %vm837, %v838, %v834
    %v840 = vadd.s32 %v835, %v839
    %v841 = vadd.s32 %v840, 536870912
    %v842 = vshrl.u32 %v841, 30
    %v843 = vshll.u32 %v842, 30
    %v844 = vsub.s32 %v840, %v843
    %vm845 = vcmp.lt.s32.totalorder %v844, 0
    %v846 = vsub.s32 0, %v844
    %v847 = vsel %vm845, %v846, %v844
    %v848 = vclz %v847
    %v849 = vsub.s32 %v848, 2
    %vm850 = vcmp.gt.s32.totalorder 0, %v849
    %v851 = vsel %vm850, 0, %v849
    %v852 = vsub.s32 32, %v851
    %v853 = vshll.u32 %v844, %v851
    %v854 = vshrl.u32 %v836, %v852
    %v855 = vor.u32 %v853, %v854
    %v856 = vsub.s32 4294967266, %v851
    %v857 = vadd.s32 %v856, 127
    %v858 = vshll.u32 %v857, 23
    %v859 = vor.u32 4788187, %v858
    %v860 = vand.u32 2147483647, %v859
    %v862 = vcvt.s32.f32 %v855
    %v863 = vmul.f32 %v862, %v860
    %v864 = vxor.u32 %v863, 2147483648
    %v865 = vsel %vm782, %v864, %v863
    %v866 = vsub.s32 4, %v842
    %v867 = vsel %vm782, %v866, %v842
    %v868 = vsel %vm781, %v54, %v865
    %v869 = vsel %vm781, 0, %v867
    %v870 = vcosq.f32.pop %v868
    %v871 = vsinq.f32.pop %v868
    %vm872 = vweird.f32 %v54
    %v873 = vand.u32 %v869, 3
    %vm874 = vcmp.lt.s32.totalorder %v873, 2
    %vm875 = vcmp.eq.s32.totalorder %v873, 0
    %v876 = vxor.u32 %v871, 2147483648
    %v877 = vsel %vm875, %v870, %v876
    %vm878 = vcmp.eq.s32.totalorder %v873, 2
    %v879 = vxor.u32 %v870, 2147483648
    %v880 = vsel %vm878, %v879, %v871
    %v881 = vsel %vm874, %v877, %v880
    %v882 = vsel %vm872, nan, %v881
    %v885 = vrot.slane %v158, 5
    %v886 = vrot.slane %v262, 5
    %v891 = vrot.slane %v573, 2
    %v892 = vrot.slane %v676, 2
    %v895 = vrot.slane %v158, 2
    %v896 = vrot.slane %v262, 2
    %v899 = vrot.slane %v573, 7
    %v900 = vrot.slane %v676, 7
    %v905 = vrot.slane %v158, 7
    %v906 = vrot.slane %v262, 7
    %v907 = vrot.slane %v366, 7
    %v908 = vsel %vm52, %v905, %v907
    %v909 = vrot.slane %v470, 7
    %v910 = vsel %vm52, %v906, %v909
    %vm917 = vcmask 1043456
    %v918 = vrot.slane %v573, 4
    %v919 = vrot.slane %v779, 4
    %v920 = vsel %vm917, %v918, %v919
    %v921 = vrot.slane %v676, 4
    %v922 = vrot.slane %v882, 4
    %v923 = vsel %vm917, %v921, %v922
    %v926 = vrot.slane %v366, 4
    %v927 = vrot.slane %v470, 4
    %v930 = vrot.slane %v779, 1
    %v931 = vrot.slane %v882, 1
    %v934 = vsel %vm46, %v21, %v885
    %v935 = vsel %vm46, %v26, %v886
    %v936 = vsel %vm49, %v934, %v891
    %v937 = vsel %vm49, %v935, %v892
    %v938 = vsel %vm52, %v891, %v895
    %v939 = vsel %vm52, %v892, %v896
    %v940 = vsel %vm917, %v938, %v899
    %v941 = vsel %vm917, %v939, %v900
    %vm942 = vcmask 1046528
    %v943 = vsel %vm942, %v940, %v905
    %v944 = vsel %vm942, %v941, %v906
    %vm945 = vcmask 1041408
    %v946 = vsel %vm945, %v908, %v920
    %v947 = vsel %vm945, %v910, %v923
    %vm948 = vcmask 1044480
    %v949 = vsel %vm948, %v946, %v926
    %v950 = vsel %vm948, %v947, %v927
    %951 = vst [vmem:[#allocation5] sm:$0xff] %v936
    %952 = vst [vmem:[#allocation5 + $0x8] sm:$0xff] %v937
    %953 = vst [vmem:[#allocation5 + $0x10] sm:$0xff] %v943
    %954 = vst [vmem:[#allocation5 + $0x18] sm:$0xff] %v944
    %955 = vst [vmem:[#allocation5 + $0x20] sm:$0xff] %v949
    %956 = vst [vmem:[#allocation5 + $0x28] sm:$0xff] %v950
    %957 = vst [vmem:[#allocation5 + $0x30] sm:$0x7] %v930
    %958 = vst [vmem:[#allocation5 + $0x38] sm:$0x7] %v931
    // Predicated region
    $region10: #{tpu_custom_call.1} parent=1 // pred_check
      _
    $region11: #{tpu_custom_call.1} parent=1 // pred_check_branch
      %960 = sbr.rel (0) target = $region13
    $region12: #{tpu_custom_call.1} parent=1 // pred_region
      %s962 = ssub.s32 1024, 1024
      %963 = vsyncadd [#allocation4], %s962
      %s964 = sshll.u32 [#allocation5], 4
      %s965 = int_to_ptr.vmem [resolvable:$true] %s964
      %970 = dma.vmem_to_hbm [thread:$0]  %s965, 1024, %s1, [#allocation4], 256, 256, 16
    $region13: #{tpu_custom_call.1} parent=1 // pred_fallthru
      _
    // Predicated region
    $region14: #{tpu_custom_call.1} parent=1 // pred_check
      _
    $region15: #{tpu_custom_call.1} parent=1 // pred_check_branch
      %972 = sbr.rel (0) target = $region17
    $region16: #{tpu_custom_call.1} parent=1 // pred_region
      %973 = dma.done [#allocation4], 1024
    $region17: #{tpu_custom_call.1} parent=1 // pred_fallthru
      _
    %974 = vsyncpa [#allocation3], 1
    %975 = vsyncpa [#allocation4], 1

</llo_original>
